<compile_context>
chip_gen: v5e
topology: v5e:2x2
jax: 0.10.0
libtpu: 0.0.40
codegen_flags: <defaults>
</compile_context>

<pallas_src>
import functools

import jax
import jax.numpy as jnp
from jax.experimental import pallas as pl
from jax.experimental.pallas import tpu as pltpu

NEG_INF = -1e9   # stands in for -inf on masked keys (avoids NaN on all-pad windows)
LN_EPS = 1e-5    # torch.nn.LayerNorm default eps


# ----------------------------- window MHA kernel ------------------------------


def _window_mha_kernel(feat_ref, pos_ref, lens_ref,
                       wqk_ref, bqk_ref, wv_ref, bv_ref, wo_ref, bo_ref,
                       out_ref, *, nhead):
    """Multi-head self-attention over a block of `wb` windows.

    feat_ref : [wb, L, E]   window features (value input)
    pos_ref  : [wb, L, E]   positional embedding (added to q/k only)
    lens_ref : [wb, 1, 1]   int32 number of valid tokens per window
    wqk_ref  : [E, 2E] bf16 pre-transposed q|k weights (1/sqrt(Dh) folded into q)
    bqk_ref  : [1, 2E] f32
    wv_ref   : [E, E]  bf16 pre-transposed v weight
    bv_ref   : [1, E]  f32
    wo_ref   : [E, E]  bf16 pre-transposed output-projection weight
    bo_ref   : [1, E]  f32
    out_ref  : [wb, L, E]
    """
    wb, L, E = feat_ref.shape
    H = nhead
    Dh = E // H

    feat = feat_ref[...].astype(jnp.float32)                 # [wb, L, E]
    pos = pos_ref[...].astype(jnp.float32)

    x_v = feat.reshape(wb * L, E).astype(jnp.bfloat16)        # value input
    x_qk = (feat + pos).reshape(wb * L, E).astype(jnp.bfloat16)   # q = k input

    # fused q/k projection as one [wb*L, E] x [E, 2E] matmul; v projection
    qk = jnp.dot(x_qk, wqk_ref[...], preferred_element_type=jnp.float32) + bqk_ref[...]
    v = jnp.dot(x_v, wv_ref[...], preferred_element_type=jnp.float32) + bv_ref[...]

    q3 = qk[:, :E].reshape(wb, L, E).astype(jnp.bfloat16)     # pre-scaled by 1/sqrt(Dh)
    k3 = qk[:, E:].reshape(wb, L, E).astype(jnp.bfloat16)
    v3 = v.reshape(wb, L, E).astype(jnp.bfloat16)

    def heads_to_batch(x):
        # (wb, L, E) -> (H*wb, L, Dh), head-major batch; one slice/concat per head
        return jnp.concatenate([x[:, :, h * Dh:(h + 1) * Dh] for h in range(H)],
                               axis=0)

    qb = heads_to_batch(q3)
    kb = heads_to_batch(k3)
    vb = heads_to_batch(v3)

    # key-padding bias from per-window valid lengths (SST masks: valid tokens
    # first).  Built once and broadcast once over heads/queries.
    key_idx = jax.lax.broadcasted_iota(jnp.int32, (wb, 1, L), 2)
    bias = jnp.where(key_idx >= lens_ref[...], NEG_INF, 0.0)           # [wb, 1, L]
    bias_b = jnp.concatenate([bias] * H, axis=0)                       # [H*wb, 1, L]

    # single batched score matmul + softmax + PV over all heads
    s = jnp.einsum('bqd,bkd->bqk', qb, kb,
                   preferred_element_type=jnp.float32)                 # [H*wb, L, L]
    s = s + bias_b
    m = jnp.max(s, axis=-1, keepdims=True)
    p = jnp.exp(s - m)
    denom = jnp.sum(p, axis=-1, keepdims=True)
    # approx reciprocal -> probs sum to 1 within ~1e-3 rel; fine for inference
    attn = (p * pl.reciprocal(denom, approx=True)).astype(jnp.bfloat16)
    # TODO(synk): attention dropout omitted (dropout=0.0 / eval mode).
    ctx_b = jnp.einsum('bqk,bkd->bqd', attn, vb,
                       preferred_element_type=jnp.float32)             # [H*wb, L, Dh]

    # merge heads back on the lane axis; single K=E output-projection matmul
    ctx = jnp.concatenate([ctx_b[h * wb:(h + 1) * wb] for h in range(H)], axis=-1)
    ctx2 = ctx.reshape(wb * L, E).astype(jnp.bfloat16)
    out = jnp.dot(ctx2, wo_ref[...], preferred_element_type=jnp.float32) + bo_ref[...]
    out_ref[...] = out.reshape(wb, L, E).astype(out_ref.dtype)


def _prep_attn_params(p, E, nhead):
    """Split/transpose packed MultiheadAttention weights; fold 1/sqrt(Dh) into q;
    cast matmul weights to bf16 (biases stay f32)."""
    Dh = E // nhead
    scale = 1.0 / (Dh ** 0.5)
    w_in = p["in_proj_weight"]                       # [3E, E]
    b_in = p["in_proj_bias"]                         # [3E]
    wq, wk, wv = w_in[:E], w_in[E:2 * E], w_in[2 * E:]
    bq, bk, bv = b_in[:E], b_in[E:2 * E], b_in[2 * E:]
    wqk_t = jnp.concatenate([wq.T * scale, wk.T], axis=1).astype(jnp.bfloat16)
    bqk = jnp.concatenate([bq * scale, bk]).reshape(1, 2 * E).astype(jnp.float32)
    wv_t = wv.T.astype(jnp.bfloat16)                                   # [E, E]
    bv2 = bv.reshape(1, E).astype(jnp.float32)
    wo_t = p["out_proj_weight"].T.astype(jnp.bfloat16)                 # [E, E]
    bo = p["out_proj_bias"].reshape(1, E).astype(jnp.float32)
    return wqk_t, bqk, wv_t, bv2, wo_t, bo


def window_mha(feat_3d, pos_3d, valid_lens, params, nhead):
    """feat_3d/pos_3d: [W, L, E]; valid_lens: [W] int32 (# valid tokens per window)."""
    W, L, E = feat_3d.shape
    assert E % nhead == 0
    dtype = feat_3d.dtype

    # pad the token axis to a sublane multiple so in-kernel reshapes are layout-free
    L_pad = ((L + 7) // 8) * 8
    if L_pad != L:
        feat_3d = jnp.pad(feat_3d, ((0, 0), (0, L_pad - L), (0, 0)))
        pos_3d = jnp.pad(pos_3d, ((0, 0), (0, L_pad - L), (0, 0)))

    # Windows per grid step: target ~512 activation rows per step so the MXU
    # M-dim is large and the ~600-cycle per-step overhead is amortized.  Small
    # problems get a single block (best for single-TC v5e/v6e); large W still
    # yields multiple "parallel" blocks for v7x's two TensorCores.
    # VMEM guard: dominant f32 intermediate is the score tensor
    # (H * wb * L_pad^2 * 4 B) plus double-buffered (wb, L_pad, E) tiles — a few
    # hundred KiB at production sizes, far below v7x's 32 MiB scoped default.
    wb = max(1, min(W, 512 // L_pad))
    W_pad = -(-W // wb) * wb
    if W_pad != W:
        feat_3d = jnp.pad(feat_3d, ((0, W_pad - W), (0, 0), (0, 0)))
        pos_3d = jnp.pad(pos_3d, ((0, W_pad - W), (0, 0), (0, 0)))
        valid_lens = jnp.pad(valid_lens, ((0, W_pad - W),))
    lens3 = valid_lens.astype(jnp.int32).reshape(W_pad, 1, 1)

    wqk_t, bqk, wv_t, bv, wo_t, bo = _prep_attn_params(params, E, nhead)
    kernel = functools.partial(_window_mha_kernel, nhead=nhead)

    out = pl.pallas_call(
        kernel,
        out_shape=jax.ShapeDtypeStruct((W_pad, L_pad, E), dtype),
        grid_spec=pltpu.PrefetchScalarGridSpec(
            num_scalar_prefetch=0,
            grid=(W_pad // wb,),
            in_specs=[
                pl.BlockSpec((wb, L_pad, E), lambda g: (g, 0, 0)),   # feat
                pl.BlockSpec((wb, L_pad, E), lambda g: (g, 0, 0)),   # pos
                pl.BlockSpec((wb, 1, 1), lambda g: (g, 0, 0)),       # valid lengths
                pl.BlockSpec((E, 2 * E), lambda g: (0, 0)),          # wqk_t (bf16)
                pl.BlockSpec((1, 2 * E), lambda g: (0, 0)),          # bqk
                pl.BlockSpec((E, E), lambda g: (0, 0)),              # wv_t (bf16)
                pl.BlockSpec((1, E), lambda g: (0, 0)),              # bv
                pl.BlockSpec((E, E), lambda g: (0, 0)),              # wo_t (bf16)
                pl.BlockSpec((1, E), lambda g: (0, 0)),              # bo
            ],
            out_specs=pl.BlockSpec((wb, L_pad, E), lambda g: (g, 0, 0)),
        ),
        compiler_params=pltpu.CompilerParams(
            dimension_semantics=("parallel",)),
    )(feat_3d, pos_3d, lens3, wqk_t, bqk, wv_t, bv, wo_t, bo)
    return out[:W, :L]


# -------------------- fused residual + LayerNorm + FFN kernel ------------------


def _encoder_ffn_kernel(src_ref, attn_ref, w1_ref, b1_ref, w2_ref, b2_ref,
                        ln1w_ref, ln1b_ref, ln2w_ref, ln2b_ref, out_ref):
    """x = LN1(src + attn);  out = LN2(x + W2 relu(W1 x))  over a row tile."""
    x = src_ref[...].astype(jnp.float32) + attn_ref[...].astype(jnp.float32)

    mu = jnp.mean(x, axis=-1, keepdims=True)
    xc = x - mu
    var = jnp.mean(xc * xc, axis=-1, keepdims=True)
    x1 = xc * jax.lax.rsqrt(var + LN_EPS) * ln1w_ref[...] + ln1b_ref[...]

    # TODO(synk): MLP dropout omitted (mlp_dropout=0 / eval mode).
    hid = jnp.dot(x1.astype(jnp.bfloat16), w1_ref[...],
                  preferred_element_type=jnp.float32) + b1_ref[...]
    hid = jnp.maximum(hid, 0.0)                                      # relu
    y = jnp.dot(hid.astype(jnp.bfloat16), w2_ref[...],
                preferred_element_type=jnp.float32) + b2_ref[...]

    x2 = x1 + y
    mu2 = jnp.mean(x2, axis=-1, keepdims=True)
    xc2 = x2 - mu2
    var2 = jnp.mean(xc2 * xc2, axis=-1, keepdims=True)
    out = xc2 * jax.lax.rsqrt(var2 + LN_EPS) * ln2w_ref[...] + ln2b_ref[...]
    out_ref[...] = out.astype(out_ref.dtype)


def encoder_ffn(src, attn_out, p):
    """src/attn_out: [N, E] flat voxel features; p: FFN + LayerNorm params."""
    N, E = src.shape
    F = p["w1"].shape[0]

    # Large row tile: weights are grid-invariant and stay resident; only the
    # (tm, E)/(tm, F) activation tiles stream.  Working set is a few MiB even
    # at production E/F, well under v7x's 32 MiB scoped VMEM.
    tm = min(1024, ((N + 7) // 8) * 8)
    N_pad = -(-N // tm) * tm
    if N_pad != N:
        src = jnp.pad(src, ((0, N_pad - N), (0, 0)))
        attn_out = jnp.pad(attn_out, ((0, N_pad - N), (0, 0)))

    w1_t = p["w1"].T.astype(jnp.bfloat16)        # [E, F]
    w2_t = p["w2"].T.astype(jnp.bfloat16)        # [F, E]
    b1 = p["b1"].reshape(1, F).astype(jnp.float32)
    b2 = p["b2"].reshape(1, E).astype(jnp.float32)
    ln1w = p["ln1_w"].reshape(1, E)
    ln1b = p["ln1_b"].reshape(1, E)
    ln2w = p["ln2_w"].reshape(1, E)
    ln2b = p["ln2_b"].reshape(1, E)

    out = pl.pallas_call(
        _encoder_ffn_kernel,
        out_shape=jax.ShapeDtypeStruct((N_pad, E), src.dtype),
        grid_spec=pltpu.PrefetchScalarGridSpec(
            num_scalar_prefetch=0,
            grid=(N_pad // tm,),
            in_specs=[
                pl.BlockSpec((tm, E), lambda i: (i, 0)),     # src
                pl.BlockSpec((tm, E), lambda i: (i, 0)),     # attention output
                pl.BlockSpec((E, F), lambda i: (0, 0)),      # w1_t (bf16)
                pl.BlockSpec((1, F), lambda i: (0, 0)),      # b1
                pl.BlockSpec((F, E), lambda i: (0, 0)),      # w2_t (bf16)
                pl.BlockSpec((1, E), lambda i: (0, 0)),      # b2
                pl.BlockSpec((1, E), lambda i: (0, 0)),      # ln1 weight
                pl.BlockSpec((1, E), lambda i: (0, 0)),      # ln1 bias
                pl.BlockSpec((1, E), lambda i: (0, 0)),      # ln2 weight
                pl.BlockSpec((1, E), lambda i: (0, 0)),      # ln2 bias
            ],
            out_specs=pl.BlockSpec((tm, E), lambda i: (i, 0)),
        ),
        compiler_params=pltpu.CompilerParams(
            dimension_semantics=("parallel",)),
    )(src, attn_out, w1_t, b1, w2_t, b2, ln1w, ln1b, ln2w, ln2b)
    return out[:N]


# ---------------- flat2window / window2flat glue (plain JAX, pure indexing) ----


def flat2window_jax(feat_2d, ind_dict, drop_info):
    """Scatter flat voxel features into zero-padded per-window 3D buffers."""
    C = feat_2d.shape[1]
    feat_3d_dict = {}
    for name, meta in ind_dict.items():
        L = drop_info[name]["max_tokens"]
        W = meta["num_windows"]
        buf = jnp.zeros((W * L, C), feat_2d.dtype)
        buf = buf.at[meta["flat_pos"]].set(feat_2d[meta["voxel_inds"]])
        feat_3d_dict[name] = buf.reshape(W, L, C)
    return feat_3d_dict


def window2flat_jax(out_feat_dict, ind_dict, num_voxels, C, dtype):
    """Gather per-window attention outputs back to the flat voxel layout."""
    results = jnp.zeros((num_voxels, C), dtype)
    for name, out_3d in out_feat_dict.items():
        meta = ind_dict[name]
        results = results.at[meta["voxel_inds"]].set(
            out_3d.reshape(-1, C)[meta["flat_pos"]])
    return results


# ------------------------------ module forward ---------------------------------


def window_attention_forward(feat_2d, pos_dict, ind_dict, key_padding_dict,
                             drop_info, attn_params, nhead):
    N, C = feat_2d.shape
    feat_3d_dict = flat2window_jax(feat_2d, ind_dict, drop_info)
    out_feat_dict = {}
    for name, feat_3d in feat_3d_dict.items():
        pos = pos_dict[name]
        if pos is None:
            pos = jnp.zeros_like(feat_3d)
        mask = key_padding_dict[name]                    # [W, L] bool, True = padded
        # TODO(synk): assumes SST-style contiguous masks (valid tokens first per window).
        valid_lens = jnp.sum(jnp.logical_not(mask), axis=1).astype(jnp.int32)
        out_feat_dict[name] = window_mha(feat_3d, pos, valid_lens, attn_params, nhead)
    return window2flat_jax(out_feat_dict, ind_dict, N, C, feat_2d.dtype)


def encoder_layer_forward(src, pos_dict, ind_dict, key_padding_dict, drop_info,
                          layer_params, nhead):
    src2 = window_attention_forward(src, pos_dict, ind_dict, key_padding_dict,
                                    drop_info, layer_params["attn"], nhead)
    return encoder_ffn(src, src2, layer_params["ffn"])


def basic_shift_block_forward(src, pos_dict_list, ind_dict_list, key_mask_dict_list,
                              drop_info, layer_params_list, nhead):
    num_shifts = len(pos_dict_list)
    assert num_shifts in (1, 2)
    output = src
    for i in range(2):
        tid = i % num_shifts
        output = encoder_layer_forward(output, pos_dict_list[tid], ind_dict_list[tid],
                                       key_mask_dict_list[tid], drop_info,
                                       layer_params_list[i], nhead)
    return output


# ------------------------------------ main --------------------------------------


def make_layer_params(key, E, F):
    ks = jax.random.split(key, 12)
    n = jax.random.normal
    return {
        "attn": {
            "in_proj_weight": 0.1 * n(ks[0], (3 * E, E), jnp.float32),
            "in_proj_bias": 0.1 * n(ks[1], (3 * E,), jnp.float32),
            "out_proj_weight": 0.1 * n(ks[2], (E, E), jnp.float32),
            "out_proj_bias": 0.1 * n(ks[3], (E,), jnp.float32),
        },
        "ffn": {
            "w1": 0.1 * n(ks[4], (F, E), jnp.float32),
            "b1": 0.1 * n(ks[5], (F,), jnp.float32),
            "w2": 0.1 * n(ks[6], (E, F), jnp.float32),
            "b2": 0.1 * n(ks[7], (E,), jnp.float32),
            "ln1_w": 1.0 + 0.05 * n(ks[8], (E,), jnp.float32),
            "ln1_b": 0.05 * n(ks[9], (E,), jnp.float32),
            "ln2_w": 1.0 + 0.05 * n(ks[10], (E,), jnp.float32),
            "ln2_b": 0.05 * n(ks[11], (E,), jnp.float32),
        },
    }


if __name__ == "__main__":
    d_model, nhead, dim_ff = 32, 4, 64

    key = jax.random.PRNGKey(0)
    k_p0, k_p1, k_feat, k_pos, k_perm = jax.random.split(key, 5)

    layer_params_list = [make_layer_params(k_p0, d_model, dim_ff),
                         make_layer_params(k_p1, d_model, dim_ff)]

    # two drop levels: "short" windows (<=8 tokens) and "long" windows (<=16 tokens)
    drop_info = {"short": {"max_tokens": 8}, "long": {"max_tokens": 16}}

    # shift 0 and shift 1 regroup the same 42 voxels into different windows
    counts0 = {"short": [5, 8, 3], "long": [16, 10]}
    counts1 = {"short": [7, 6, 3], "long": [12, 14]}
    N = sum(counts0["short"]) + sum(counts0["long"])          # 42 voxels
    assert N == sum(counts1["short"]) + sum(counts1["long"])

    order0 = jnp.arange(N, dtype=jnp.int32)
    order1 = jax.random.permutation(k_perm, N).astype(jnp.int32)

    def build_shift(order, counts, pos_keys, with_long_pos):
        pos_dict, ind_dict, key_mask_dict = {}, {}, {}
        off = 0
        for li, name in enumerate(("short", "long")):
            L = drop_info[name]["max_tokens"]
            cs = counts[name]
            n_vox = sum(cs)
            voxel_inds = order[off:off + n_vox]
            off += n_vox
            flat_pos = jnp.concatenate([
                jnp.arange(w * L, w * L + c, dtype=jnp.int32)
                for w, c in enumerate(cs)])
            mask = jnp.stack([jnp.arange(L) >= c for c in cs])    # True = padded key
            ind_dict[name] = {"voxel_inds": voxel_inds, "flat_pos": flat_pos,
                              "num_windows": len(cs)}
            key_mask_dict[name] = mask
            if name == "long" and not with_long_pos:
                pos_dict[name] = None          # exercise the pos=None branch
            else:
                pos_dict[name] = jax.random.normal(
                    pos_keys[li], (len(cs), L, d_model), jnp.float32)
        return pos_dict, ind_dict, key_mask_dict

    pk = jax.random.split(k_pos, 4)
    pos0, ind0, km0 = build_shift(order0, counts0, pk[:2], with_long_pos=True)
    pos1, ind1, km1 = build_shift(order1, counts1, pk[2:], with_long_pos=False)

    src = jax.random.normal(k_feat, (N, d_model), jnp.float32)

    out = basic_shift_block_forward(
        src, [pos0, pos1], [ind0, ind1], [km0, km1],
        drop_info, layer_params_list, nhead)
    out = jax.block_until_ready(out)

    assert out.shape == (N, d_model)
    assert bool(jnp.all(jnp.isfinite(out)))
    print("KERNEL_OK")
</pallas_src>

<mosaic_0001>
module attributes {stable_mosaic.version = 11 : i64} {
  func.func @_window_mha_kernel(%arg0: i32, %arg1: memref<3x8x32xf32, #tpu.memory_space<vmem>>, %arg2: memref<3x8x32xf32, #tpu.memory_space<vmem>>, %arg3: memref<3x1x1xi32, #tpu.memory_space<vmem>>, %arg4: memref<32x64xbf16, #tpu.memory_space<vmem>>, %arg5: memref<1x64xf32, #tpu.memory_space<vmem>>, %arg6: memref<32x32xbf16, #tpu.memory_space<vmem>>, %arg7: memref<1x32xf32, #tpu.memory_space<vmem>>, %arg8: memref<32x32xbf16, #tpu.memory_space<vmem>>, %arg9: memref<1x32xf32, #tpu.memory_space<vmem>>, %arg10: memref<3x8x32xf32, #tpu.memory_space<vmem>>) attributes {dimension_semantics = [#tpu.dimension_semantics<parallel>], iteration_bounds = array<i64: 1>, scalar_prefetch = 0 : i64, scratch_operands = 0 : i64, tpu.core_type = #tpu.core_type<tc>, window_params = [{transform_indices = @transform_0, window_bounds = array<i64: 3, 8, 32>}, {transform_indices = @transform_1, window_bounds = array<i64: 3, 8, 32>}, {transform_indices = @transform_2, window_bounds = array<i64: 3, 1, 1>}, {pipeline_mode = #tpu.pipeline_mode<synchronous>, transform_indices = @transform_3, window_bounds = array<i64: 32, 64>}, {pipeline_mode = #tpu.pipeline_mode<synchronous>, transform_indices = @transform_4, window_bounds = array<i64: 1, 64>}, {pipeline_mode = #tpu.pipeline_mode<synchronous>, transform_indices = @transform_5, window_bounds = array<i64: 32, 32>}, {pipeline_mode = #tpu.pipeline_mode<synchronous>, transform_indices = @transform_6, window_bounds = array<i64: 1, 32>}, {pipeline_mode = #tpu.pipeline_mode<synchronous>, transform_indices = @transform_7, window_bounds = array<i64: 32, 32>}, {pipeline_mode = #tpu.pipeline_mode<synchronous>, transform_indices = @transform_8, window_bounds = array<i64: 1, 32>}, {transform_indices = @transform_9, window_bounds = array<i64: 3, 8, 32>}]} {
    %c0 = arith.constant 0 : index
    %c0_0 = arith.constant 0 : index
    %c0_1 = arith.constant 0 : index
    %0 = vector.load %arg1[%c0, %c0_0, %c0_1] : memref<3x8x32xf32, #tpu.memory_space<vmem>>, vector<3x8x32xf32>
    %c0_2 = arith.constant 0 : index
    %c0_3 = arith.constant 0 : index
    %c0_4 = arith.constant 0 : index
    %1 = vector.load %arg2[%c0_2, %c0_3, %c0_4] : memref<3x8x32xf32, #tpu.memory_space<vmem>>, vector<3x8x32xf32>
    %2 = vector.shape_cast %0 : vector<3x8x32xf32> to vector<24x32xf32>
    %3 = arith.truncf %2 : vector<24x32xf32> to vector<24x32xbf16>
    %4 = arith.addf %0, %1 : vector<3x8x32xf32>
    %5 = vector.shape_cast %4 : vector<3x8x32xf32> to vector<24x32xf32>
    %6 = arith.truncf %5 : vector<24x32xf32> to vector<24x32xbf16>
    %c0_5 = arith.constant 0 : index
    %c0_6 = arith.constant 0 : index
    %7 = vector.load %arg4[%c0_5, %c0_6] : memref<32x64xbf16, #tpu.memory_space<vmem>>, vector<32x64xbf16>
    %cst = arith.constant dense<0.000000e+00> : vector<24x64xf32>
    %8 = tpu.matmul %6, %7, %cst {dimension_numbers = #tpu.dot_dimension_numbers<[1], [0], [0], [1], [0, 0, 1, 1], [], []>} : vector<24x32xbf16>, vector<32x64xbf16>, vector<24x64xf32> -> vector<24x64xf32>
    %c0_7 = arith.constant 0 : index
    %c0_8 = arith.constant 0 : index
    %9 = vector.load %arg5[%c0_7, %c0_8] : memref<1x64xf32, #tpu.memory_space<vmem>>, vector<1x64xf32>
    %10 = vector.broadcast %9 : vector<1x64xf32> to vector<24x64xf32>
    %11 = arith.addf %8, %10 : vector<24x64xf32>
    %c0_9 = arith.constant 0 : index
    %c0_10 = arith.constant 0 : index
    %12 = vector.load %arg6[%c0_9, %c0_10] : memref<32x32xbf16, #tpu.memory_space<vmem>>, vector<32x32xbf16>
    %cst_11 = arith.constant dense<0.000000e+00> : vector<24x32xf32>
    %13 = tpu.matmul %3, %12, %cst_11 {dimension_numbers = #tpu.dot_dimension_numbers<[1], [0], [0], [1], [0, 0, 1, 1], [], []>} : vector<24x32xbf16>, vector<32x32xbf16>, vector<24x32xf32> -> vector<24x32xf32>
    %c0_12 = arith.constant 0 : index
    %c0_13 = arith.constant 0 : index
    %14 = vector.load %arg7[%c0_12, %c0_13] : memref<1x32xf32, #tpu.memory_space<vmem>>, vector<1x32xf32>
    %15 = vector.broadcast %14 : vector<1x32xf32> to vector<24x32xf32>
    %16 = arith.addf %13, %15 : vector<24x32xf32>
    %17 = vector.extract_strided_slice %11 {offsets = [0, 0], sizes = [24, 32], strides = [1, 1]} : vector<24x64xf32> to vector<24x32xf32>
    %18 = vector.shape_cast %17 : vector<24x32xf32> to vector<3x8x32xf32>
    %19 = arith.truncf %18 : vector<3x8x32xf32> to vector<3x8x32xbf16>
    %20 = vector.extract_strided_slice %11 {offsets = [0, 32], sizes = [24, 32], strides = [1, 1]} : vector<24x64xf32> to vector<24x32xf32>
    %21 = vector.shape_cast %20 : vector<24x32xf32> to vector<3x8x32xf32>
    %22 = arith.truncf %21 : vector<3x8x32xf32> to vector<3x8x32xbf16>
    %23 = vector.shape_cast %16 : vector<24x32xf32> to vector<3x8x32xf32>
    %24 = arith.truncf %23 : vector<3x8x32xf32> to vector<3x8x32xbf16>
    %25 = vector.extract_strided_slice %19 {offsets = [0, 0, 0], sizes = [3, 8, 8], strides = [1, 1, 1]} : vector<3x8x32xbf16> to vector<3x8x8xbf16>
    %26 = vector.extract_strided_slice %19 {offsets = [0, 0, 8], sizes = [3, 8, 8], strides = [1, 1, 1]} : vector<3x8x32xbf16> to vector<3x8x8xbf16>
    %27 = vector.extract_strided_slice %19 {offsets = [0, 0, 16], sizes = [3, 8, 8], strides = [1, 1, 1]} : vector<3x8x32xbf16> to vector<3x8x8xbf16>
    %28 = vector.extract_strided_slice %19 {offsets = [0, 0, 24], sizes = [3, 8, 8], strides = [1, 1, 1]} : vector<3x8x32xbf16> to vector<3x8x8xbf16>
    %29 = tpu.concatenate %25, %26, %27, %28 in 0 : vector<3x8x8xbf16>, vector<3x8x8xbf16>, vector<3x8x8xbf16>, vector<3x8x8xbf16> -> vector<12x8x8xbf16>
    %30 = vector.extract_strided_slice %22 {offsets = [0, 0, 0], sizes = [3, 8, 8], strides = [1, 1, 1]} : vector<3x8x32xbf16> to vector<3x8x8xbf16>
    %31 = vector.extract_strided_slice %22 {offsets = [0, 0, 8], sizes = [3, 8, 8], strides = [1, 1, 1]} : vector<3x8x32xbf16> to vector<3x8x8xbf16>
    %32 = vector.extract_strided_slice %22 {offsets = [0, 0, 16], sizes = [3, 8, 8], strides = [1, 1, 1]} : vector<3x8x32xbf16> to vector<3x8x8xbf16>
    %33 = vector.extract_strided_slice %22 {offsets = [0, 0, 24], sizes = [3, 8, 8], strides = [1, 1, 1]} : vector<3x8x32xbf16> to vector<3x8x8xbf16>
    %34 = tpu.concatenate %30, %31, %32, %33 in 0 : vector<3x8x8xbf16>, vector<3x8x8xbf16>, vector<3x8x8xbf16>, vector<3x8x8xbf16> -> vector<12x8x8xbf16>
    %35 = vector.extract_strided_slice %24 {offsets = [0, 0, 0], sizes = [3, 8, 8], strides = [1, 1, 1]} : vector<3x8x32xbf16> to vector<3x8x8xbf16>
    %36 = vector.extract_strided_slice %24 {offsets = [0, 0, 8], sizes = [3, 8, 8], strides = [1, 1, 1]} : vector<3x8x32xbf16> to vector<3x8x8xbf16>
    %37 = vector.extract_strided_slice %24 {offsets = [0, 0, 16], sizes = [3, 8, 8], strides = [1, 1, 1]} : vector<3x8x32xbf16> to vector<3x8x8xbf16>
    %38 = vector.extract_strided_slice %24 {offsets = [0, 0, 24], sizes = [3, 8, 8], strides = [1, 1, 1]} : vector<3x8x32xbf16> to vector<3x8x8xbf16>
    %39 = tpu.concatenate %35, %36, %37, %38 in 0 : vector<3x8x8xbf16>, vector<3x8x8xbf16>, vector<3x8x8xbf16>, vector<3x8x8xbf16> -> vector<12x8x8xbf16>
    %40 = tpu.iota {dimensions = array<i32: 2>} : vector<3x1x8xi32>
    %c0_14 = arith.constant 0 : index
    %c0_15 = arith.constant 0 : index
    %c0_16 = arith.constant 0 : index
    %41 = vector.load %arg3[%c0_14, %c0_15, %c0_16] : memref<3x1x1xi32, #tpu.memory_space<vmem>>, vector<3x1x1xi32>
    %42 = vector.broadcast %41 : vector<3x1x1xi32> to vector<3x1x8xi32>
    %43 = arith.cmpi sge, %40, %42 : vector<3x1x8xi32>
    %cst_17 = arith.constant -1.000000e+09 : f32
    %cst_18 = arith.constant 0.000000e+00 : f32
    %44 = vector.broadcast %cst_17 : f32 to vector<3x1x8xf32>
    %45 = vector.broadcast %cst_18 : f32 to vector<3x1x8xf32>
    %46 = arith.select %43, %44, %45 : vector<3x1x8xi1>, vector<3x1x8xf32>
    %47 = tpu.concatenate %46, %46, %46, %46 in 0 : vector<3x1x8xf32>, vector<3x1x8xf32>, vector<3x1x8xf32>, vector<3x1x8xf32> -> vector<12x1x8xf32>
    "tpu.trace_start"() <{level = 10 : i32, message = "bqd,bkd->bqk"}> : () -> ()
    %cst_19 = arith.constant dense<0.000000e+00> : vector<12x8x8xf32>
    %48 = tpu.matmul %29, %34, %cst_19 {dimension_numbers = #tpu.dot_dimension_numbers<[2], [2], [1], [1], [0, 0, 0, 1, 1, 1], [0], [0]>} : vector<12x8x8xbf16>, vector<12x8x8xbf16>, vector<12x8x8xf32> -> vector<12x8x8xf32>
    "tpu.trace_stop"() : () -> ()
    %49 = vector.broadcast %47 : vector<12x1x8xf32> to vector<12x8x8xf32>
    %50 = arith.addf %48, %49 : vector<12x8x8xf32>
    %cst_20 = arith.constant dense<0xFF800000> : vector<12x8xf32>
    %51 = vector.multi_reduction <maximumf>, %50, %cst_20 [2] : vector<12x8x8xf32> to vector<12x8xf32>
    %52 = vector.shape_cast %51 : vector<12x8xf32> to vector<12x8x1xf32>
    %53 = vector.broadcast %52 : vector<12x8x1xf32> to vector<12x8x8xf32>
    %54 = arith.subf %50, %53 : vector<12x8x8xf32>
    %55 = math.exp %54 : vector<12x8x8xf32>
    %cst_21 = arith.constant dense<0.000000e+00> : vector<12x8xf32>
    %56 = vector.multi_reduction <add>, %55, %cst_21 [2] : vector<12x8x8xf32> to vector<12x8xf32>
    %57 = vector.shape_cast %56 : vector<12x8xf32> to vector<12x8x1xf32>
    %58 = tpu.reciprocal %57 {approx = true} : vector<12x8x1xf32> -> vector<12x8x1xf32>
    %59 = vector.broadcast %58 : vector<12x8x1xf32> to vector<12x8x8xf32>
    %60 = arith.mulf %55, %59 : vector<12x8x8xf32>
    %61 = arith.truncf %60 : vector<12x8x8xf32> to vector<12x8x8xbf16>
    "tpu.trace_start"() <{level = 10 : i32, message = "bqk,bkd->bqd"}> : () -> ()
    %cst_22 = arith.constant dense<0.000000e+00> : vector<12x8x8xf32>
    %62 = tpu.matmul %61, %39, %cst_22 {dimension_numbers = #tpu.dot_dimension_numbers<[2], [1], [1], [2], [0, 0, 0, 1, 1, 2], [0], [0]>} : vector<12x8x8xbf16>, vector<12x8x8xbf16>, vector<12x8x8xf32> -> vector<12x8x8xf32>
    "tpu.trace_stop"() : () -> ()
    %63 = vector.extract_strided_slice %62 {offsets = [0, 0, 0], sizes = [3, 8, 8], strides = [1, 1, 1]} : vector<12x8x8xf32> to vector<3x8x8xf32>
    %64 = vector.extract_strided_slice %62 {offsets = [3, 0, 0], sizes = [3, 8, 8], strides = [1, 1, 1]} : vector<12x8x8xf32> to vector<3x8x8xf32>
    %65 = vector.extract_strided_slice %62 {offsets = [6, 0, 0], sizes = [3, 8, 8], strides = [1, 1, 1]} : vector<12x8x8xf32> to vector<3x8x8xf32>
    %66 = vector.extract_strided_slice %62 {offsets = [9, 0, 0], sizes = [3, 8, 8], strides = [1, 1, 1]} : vector<12x8x8xf32> to vector<3x8x8xf32>
    %67 = tpu.concatenate %63, %64, %65, %66 in 2 : vector<3x8x8xf32>, vector<3x8x8xf32>, vector<3x8x8xf32>, vector<3x8x8xf32> -> vector<3x8x32xf32>
    %68 = vector.shape_cast %67 : vector<3x8x32xf32> to vector<24x32xf32>
    %69 = arith.truncf %68 : vector<24x32xf32> to vector<24x32xbf16>
    %c0_23 = arith.constant 0 : index
    %c0_24 = arith.constant 0 : index
    %70 = vector.load %arg8[%c0_23, %c0_24] : memref<32x32xbf16, #tpu.memory_space<vmem>>, vector<32x32xbf16>
    %cst_25 = arith.constant dense<0.000000e+00> : vector<24x32xf32>
    %71 = tpu.matmul %69, %70, %cst_25 {dimension_numbers = #tpu.dot_dimension_numbers<[1], [0], [0], [1], [0, 0, 1, 1], [], []>} : vector<24x32xbf16>, vector<32x32xbf16>, vector<24x32xf32> -> vector<24x32xf32>
    %c0_26 = arith.constant 0 : index
    %c0_27 = arith.constant 0 : index
    %72 = vector.load %arg9[%c0_26, %c0_27] : memref<1x32xf32, #tpu.memory_space<vmem>>, vector<1x32xf32>
    %73 = vector.broadcast %72 : vector<1x32xf32> to vector<24x32xf32>
    %74 = arith.addf %71, %73 : vector<24x32xf32>
    %75 = vector.shape_cast %74 : vector<24x32xf32> to vector<3x8x32xf32>
    %c0_28 = arith.constant 0 : index
    %c0_29 = arith.constant 0 : index
    %c0_30 = arith.constant 0 : index
    %76 = vector.load %arg10[%c0_28, %c0_29, %c0_30] : memref<3x8x32xf32, #tpu.memory_space<vmem>>, vector<3x8x32xf32>
    tpu.vector_store %arg10[%c0_28, %c0_29, %c0_30], %75 {strides = array<i32>} : memref<3x8x32xf32, #tpu.memory_space<vmem>>, vector<3x8x32xf32>,
    return
  }
  func.func @transform_0(%arg0: i32) -> (i32, i32, i32) {
    %c0_i32 = arith.constant 0 : i32
    %c0_i32_0 = arith.constant 0 : i32
    %c0_i32_1 = arith.constant 0 : i32
    return %arg0, %c0_i32, %c0_i32_0 : i32, i32, i32
  }
  func.func @transform_1(%arg0: i32) -> (i32, i32, i32) {
    %c0_i32 = arith.constant 0 : i32
    %c0_i32_0 = arith.constant 0 : i32
    %c0_i32_1 = arith.constant 0 : i32
    return %arg0, %c0_i32, %c0_i32_0 : i32, i32, i32
  }
  func.func @transform_2(%arg0: i32) -> (i32, i32, i32) {
    %c0_i32 = arith.constant 0 : i32
    %c0_i32_0 = arith.constant 0 : i32
    %c0_i32_1 = arith.constant 0 : i32
    return %arg0, %c0_i32, %c0_i32_0 : i32, i32, i32
  }
  func.func @transform_3(%arg0: i32) -> (i32, i32) {
    %c0_i32 = arith.constant 0 : i32
    %c0_i32_0 = arith.constant 0 : i32
    %c0_i32_1 = arith.constant 0 : i32
    return %c0_i32, %c0_i32_0 : i32, i32
  }
  func.func @transform_4(%arg0: i32) -> (i32, i32) {
    %c0_i32 = arith.constant 0 : i32
    %c0_i32_0 = arith.constant 0 : i32
    %c0_i32_1 = arith.constant 0 : i32
    return %c0_i32, %c0_i32_0 : i32, i32
  }
  func.func @transform_5(%arg0: i32) -> (i32, i32) {
    %c0_i32 = arith.constant 0 : i32
    %c0_i32_0 = arith.constant 0 : i32
    %c0_i32_1 = arith.constant 0 : i32
    return %c0_i32, %c0_i32_0 : i32, i32
  }
  func.func @transform_6(%arg0: i32) -> (i32, i32) {
    %c0_i32 = arith.constant 0 : i32
    %c0_i32_0 = arith.constant 0 : i32
    %c0_i32_1 = arith.constant 0 : i32
    return %c0_i32, %c0_i32_0 : i32, i32
  }
  func.func @transform_7(%arg0: i32) -> (i32, i32) {
    %c0_i32 = arith.constant 0 : i32
    %c0_i32_0 = arith.constant 0 : i32
    %c0_i32_1 = arith.constant 0 : i32
    return %c0_i32, %c0_i32_0 : i32, i32
  }
  func.func @transform_8(%arg0: i32) -> (i32, i32) {
    %c0_i32 = arith.constant 0 : i32
    %c0_i32_0 = arith.constant 0 : i32
    %c0_i32_1 = arith.constant 0 : i32
    return %c0_i32, %c0_i32_0 : i32, i32
  }
  func.func @transform_9(%arg0: i32) -> (i32, i32, i32) {
    %c0_i32 = arith.constant 0 : i32
    %c0_i32_0 = arith.constant 0 : i32
    %c0_i32_1 = arith.constant 0 : i32
    return %arg0, %c0_i32, %c0_i32_0 : i32, i32, i32
  }
}

</mosaic_0001>

<llo_original>
// kernel: tpu_custom_call.1
$region0: #{tpu_custom_call.1}
  #allocation0 [shape = 'u32[]', space=smem, size = 0x4, offset = 0x4, fixed_abs, tag = 'smem constant byte address 0x4 - core index']
  #allocation1 [shape = 'u32[72,128]{1,0:T(1,128)}', space=vmem, size = 0x9000, scoped, tag = 'internal scratch']
  %s0 = inlined_call_operand.hbm [shape: f32[3,8,32], index: 0, kind: input, shape index: {}]
  %s1 = inlined_call_operand.hbm [shape: f32[3,8,32], index: 1, kind: input, shape index: {}]
  %s2 = inlined_call_operand.vmem [shape: s32[3,1,1], index: 2, kind: input, shape index: {}]
  %s3 = inlined_call_operand.hbm [shape: bf16[32,64], index: 3, kind: input, shape index: {}]
  %s4 = inlined_call_operand.vmem [shape: f32[1,64], index: 4, kind: input, shape index: {}]
  %s5 = inlined_call_operand.hbm [shape: bf16[32,32], index: 5, kind: input, shape index: {}]
  %s6 = inlined_call_operand.vmem [shape: f32[1,32], index: 6, kind: input, shape index: {}]
  %s7 = inlined_call_operand.hbm [shape: bf16[32,32], index: 7, kind: input, shape index: {}]
  %s8 = inlined_call_operand.vmem [shape: f32[1,32], index: 8, kind: input, shape index: {}]
  %s9 = inlined_call_operand.hbm [shape: f32[3,8,32], index: 9, kind: output, shape index: {}]
  %s10 = sld [smem:[#allocation0]]
  $region66: #{tpu_custom_call.1} parent=0
    _
  %s12 = ssub.s32 1, %s10
  %s13 = scalar_select 0, %s12, %s10
  $region1: #{tpu_custom_call.1} parent=0
    #allocation2 [shape = 'u8[12288]{0}', space=vmem, size = 0x3000, scoped, tag = 'input window, operand 0, single buffered']
    #allocation3 [shape = 's32[1]{0}', space=sflag, size = 0x4, scoped, tag = 'scoped memory for tpu_custom_call.1']
    #allocation4 [shape = 's32[1]{0}', space=sflag, size = 0x4, scoped, tag = 'scoped memory for tpu_custom_call.1']
    #allocation5 [shape = 'u8[12288]{0}', space=vmem, size = 0x3000, scoped, tag = 'input window, operand 1, single buffered']
    #allocation6 [shape = 's32[1]{0}', space=sflag, size = 0x4, scoped, tag = 'scoped memory for tpu_custom_call.1']
    #allocation7 [shape = 'u8[8192]{0}', space=vmem, size = 0x2000, scoped, tag = 'input window, operand 3, single buffered']
    #allocation8 [shape = 'u8[8192]{0}', space=vmem, size = 0x2000, scoped, tag = 'input window, operand 5, single buffered']
    #allocation9 [shape = 's32[1]{0}', space=sflag, size = 0x4, scoped, tag = 'scoped memory for tpu_custom_call.1']
    #allocation10 [shape = 'u8[8192]{0}', space=vmem, size = 0x2000, scoped, tag = 'input window, operand 7, single buffered']
    #allocation11 [shape = 'u8[12288]{0}', space=vmem, size = 0x3000, scoped, tag = 'output window, operand 0, single buffered']
    %14 = vsyncpa [#allocation3], 0
    %15 = vsyncpa [#allocation6], 0
    %16 = vsyncpa [#allocation9], 0
    %17 = vsyncpa [#allocation4], 0
    // Predicated region
    $region2: #{tpu_custom_call.1} parent=1 // pred_check
      _
    $region3: #{tpu_custom_call.1} parent=1 // pred_check_branch
      %19 = sbr.rel (0) target = $region5
    $region4: #{tpu_custom_call.1} parent=1 // pred_region
      %21 = vsyncadd [#allocation3], 0
      %s22 = sshll.u32 %s0, 4
      %s23 = int_to_ptr.hbm [resolvable:$true] %s22
      %s24 = sshll.u32 [#allocation2], 4
      %s25 = int_to_ptr.vmem [resolvable:$true] %s24
      %30 = dma.hbm_to_vmem [thread:$0]  %s23, 384, %s25, [#allocation3], 128, 128, 8
    $region5: #{tpu_custom_call.1} parent=1 // pred_fallthru
      _
    // Predicated region
    $region6: #{tpu_custom_call.1} parent=1 // pred_check
      _
    $region7: #{tpu_custom_call.1} parent=1 // pred_check_branch
      %32 = sbr.rel (0) target = $region9
    $region8: #{tpu_custom_call.1} parent=1 // pred_region
      %34 = vsyncadd [#allocation6], 0
      %s35 = sshll.u32 %s1, 4
      %s36 = int_to_ptr.hbm [resolvable:$true] %s35
      %s37 = sshll.u32 [#allocation5], 4
      %s38 = int_to_ptr.vmem [resolvable:$true] %s37
      %43 = dma.hbm_to_vmem [thread:$0]  %s36, 384, %s38, [#allocation6], 128, 128, 8
    $region9: #{tpu_custom_call.1} parent=1 // pred_fallthru
      _
    // Predicated region
    $region10: #{tpu_custom_call.1} parent=1 // pred_check
      _
    $region11: #{tpu_custom_call.1} parent=1 // pred_check_branch
      %45 = sbr.rel (0) target = $region13
    $region12: #{tpu_custom_call.1} parent=1 // pred_region
      _
    $region13: #{tpu_custom_call.1} parent=1 // pred_fallthru
      _
    // Predicated region
    $region14: #{tpu_custom_call.1} parent=1 // pred_check
      _
    $region15: #{tpu_custom_call.1} parent=1 // pred_check_branch
      %47 = sbr.rel (0) target = $region17
    $region16: #{tpu_custom_call.1} parent=1 // pred_region
      %49 = vsyncadd [#allocation6], 0
      %s50 = sshll.u32 %s3, 4
      %s51 = int_to_ptr.hbm [resolvable:$true] %s50
      %s52 = sshll.u32 [#allocation7], 4
      %s53 = int_to_ptr.vmem [resolvable:$true] %s52
      %58 = dma.hbm_to_vmem [thread:$0]  %s51, 256, %s53, [#allocation6], 64, 64, 4
    $region17: #{tpu_custom_call.1} parent=1 // pred_fallthru
      _
    // Predicated region
    $region18: #{tpu_custom_call.1} parent=1 // pred_check
      _
    $region19: #{tpu_custom_call.1} parent=1 // pred_check_branch
      %60 = sbr.rel (0) target = $region21
    $region20: #{tpu_custom_call.1} parent=1 // pred_region
      _
    $region21: #{tpu_custom_call.1} parent=1 // pred_fallthru
      _
    // Predicated region
    $region22: #{tpu_custom_call.1} parent=1 // pred_check
      _
    $region23: #{tpu_custom_call.1} parent=1 // pred_check_branch
      %62 = sbr.rel (0) target = $region25
    $region24: #{tpu_custom_call.1} parent=1 // pred_region
      %64 = vsyncadd [#allocation9], 0
      %s65 = sshll.u32 %s5, 4
      %s66 = int_to_ptr.hbm [resolvable:$true] %s65
      %s67 = sshll.u32 [#allocation8], 4
      %s68 = int_to_ptr.vmem [resolvable:$true] %s67
      %73 = dma.hbm_to_vmem [thread:$0]  %s66, 256, %s68, [#allocation9], 64, 64, 4
    $region25: #{tpu_custom_call.1} parent=1 // pred_fallthru
      _
    // Predicated region
    $region26: #{tpu_custom_call.1} parent=1 // pred_check
      _
    $region27: #{tpu_custom_call.1} parent=1 // pred_check_branch
      %75 = sbr.rel (0) target = $region29
    $region28: #{tpu_custom_call.1} parent=1 // pred_region
      _
    $region29: #{tpu_custom_call.1} parent=1 // pred_fallthru
      _
    // Predicated region
    $region30: #{tpu_custom_call.1} parent=1 // pred_check
      _
    $region31: #{tpu_custom_call.1} parent=1 // pred_check_branch
      %77 = sbr.rel (0) target = $region33
    $region32: #{tpu_custom_call.1} parent=1 // pred_region
      %79 = vsyncadd [#allocation9], 0
      %s80 = sshll.u32 %s7, 4
      %s81 = int_to_ptr.hbm [resolvable:$true] %s80
      %s82 = sshll.u32 [#allocation10], 4
      %s83 = int_to_ptr.vmem [resolvable:$true] %s82
      %88 = dma.hbm_to_vmem [thread:$0]  %s81, 256, %s83, [#allocation9], 64, 64, 4
    $region33: #{tpu_custom_call.1} parent=1 // pred_fallthru
      _
    // Predicated region
    $region34: #{tpu_custom_call.1} parent=1 // pred_check
      _
    $region35: #{tpu_custom_call.1} parent=1 // pred_check_branch
      %90 = sbr.rel (0) target = $region37
    $region36: #{tpu_custom_call.1} parent=1 // pred_region
      _
    $region37: #{tpu_custom_call.1} parent=1 // pred_fallthru
      _
    // Predicated region
    $region38: #{tpu_custom_call.1} parent=1 // pred_check
      _
    $region39: #{tpu_custom_call.1} parent=1 // pred_check_branch
      %92 = sbr.rel (0) target = $region41
    $region40: #{tpu_custom_call.1} parent=1 // pred_region
      %94 = dma.done [#allocation3], 384
    $region41: #{tpu_custom_call.1} parent=1 // pred_fallthru
      _
    // Predicated region
    $region42: #{tpu_custom_call.1} parent=1 // pred_check
      _
    $region43: #{tpu_custom_call.1} parent=1 // pred_check_branch
      %96 = sbr.rel (0) target = $region45
    $region44: #{tpu_custom_call.1} parent=1 // pred_region
      %98 = dma.done [#allocation6], 384
    $region45: #{tpu_custom_call.1} parent=1 // pred_fallthru
      _
    // Predicated region
    $region46: #{tpu_custom_call.1} parent=1 // pred_check
      _
    $region47: #{tpu_custom_call.1} parent=1 // pred_check_branch
      %100 = sbr.rel (0) target = $region49
    $region48: #{tpu_custom_call.1} parent=1 // pred_region
      %102 = dma.done [#allocation6], 256
    $region49: #{tpu_custom_call.1} parent=1 // pred_fallthru
      _
    // Predicated region
    $region50: #{tpu_custom_call.1} parent=1 // pred_check
      _
    $region51: #{tpu_custom_call.1} parent=1 // pred_check_branch
      %104 = sbr.rel (0) target = $region53
    $region52: #{tpu_custom_call.1} parent=1 // pred_region
      %106 = dma.done [#allocation9], 256
    $region53: #{tpu_custom_call.1} parent=1 // pred_fallthru
      _
    // Predicated region
    $region54: #{tpu_custom_call.1} parent=1 // pred_check
      _
    $region55: #{tpu_custom_call.1} parent=1 // pred_check_branch
      %108 = sbr.rel (0) target = $region57
    $region56: #{tpu_custom_call.1} parent=1 // pred_region
      %110 = dma.done [#allocation9], 256
    $region57: #{tpu_custom_call.1} parent=1 // pred_fallthru
      _
    %v112 = vld [vmem:[#allocation2] sm:$0xff]
    %v113 = vld [vmem:[#allocation2 + $0x8] sm:$0xff]
    %v114 = vld [vmem:[#allocation2 + $0x10] sm:$0xff]
    %v115 = vld [vmem:[#allocation5] sm:$0xff]
    %v116 = vld [vmem:[#allocation5 + $0x8] sm:$0xff]
    %v117 = vld [vmem:[#allocation5 + $0x10] sm:$0xff]
    %v118 = vpack.c.bf16 %v113, %v112
    %v119 = vpack.c.bf16 %v114, %v114
    %v120 = vadd.f32 %v112, %v115
    %v121 = vadd.f32 %v113, %v116
    %v122 = vadd.f32 %v114, %v117
    %v123 = vpack.c.bf16 %v121, %v120
    %v124 = vpack.c.bf16 %v122, %v122
    %v125 = vld [vmem:[#allocation7] sm:$0xf]
    %v126 = vld [vmem:[#allocation7 + $0x4] sm:$0xf]
    %v127 = vld [vmem:[#allocation7 + $0x8] sm:$0xf]
    %v128 = vld [vmem:[#allocation7 + $0xc] sm:$0xf]
    %v129 = vld [vmem:[%s4] sm:$0x1]
    %v131 = vperm.slane %v129, 0
    %v137 = vunpack.c.l.b16 %v125
    %v138 = vunpack.c.l.b16 %v126
    %v139 = vunpack.c.l.b16 %v127
    %v140 = vunpack.c.l.b16 %v128
    %v141 = vpack.c.b16 %v138, %v137
    %v142 = vpack.c.b16 %v140, %v139
    %vm145 = vcmask 261120
    %v147 = vsel %vm145, %v123, 0
    %v150 = vsel %vm145, %v124, 0
    %152 = vmatpush.bf16.msra.mxu0 0
    %153 = vmatpush.bf16.msra.mxu0 0
    %154 = vmatpush.bf16.msra.mxu0 0
    %155 = vmatpush.bf16.msra.mxu0 0
    %156 = vmatpush.bf16.msra.mxu0 0
    %157 = vmatpush.bf16.msra.mxu0 0
    %158 = vmatpush.bf16.msra.mxu0 %v142
    %159 = vmatpush.bf16.msra.mxu0 %v141
    %160 = vmatmul.bf16.gmra.mxu0 %v147
    %v161 = vpop.f32.mrf.mxu0
    %v162 = vadd.f32 %v131, %v161
    %v163 = vpop.f32.mrf.mxu0
    %v164 = vadd.f32 %v131, %v163
    %165 = vmatmul.bf16.gmra.mxu0 %v150
    %v166 = vpop.f32.mrf.mxu0
    %v167 = vadd.f32 %v131, %v166
    %v168 = vpop.f32.mrf.mxu0
    %169 = vdwg.mxu0
    %v170 = vld [vmem:[#allocation8] sm:$0xf]
    %v171 = vld [vmem:[#allocation8 + $0x4] sm:$0xf]
    %v172 = vld [vmem:[#allocation8 + $0x8] sm:$0xf]
    %v173 = vld [vmem:[#allocation8 + $0xc] sm:$0xf]
    %v174 = vld [vmem:[%s6] sm:$0x1]
    %v176 = vperm.slane %v174, 0
    %v182 = vunpack.c.l.b16 %v170
    %v183 = vunpack.c.l.b16 %v171
    %v184 = vunpack.c.l.b16 %v172
    %v185 = vunpack.c.l.b16 %v173
    %v186 = vpack.c.b16 %v183, %v182
    %v187 = vpack.c.b16 %v185, %v184
    %v191 = vsel %vm145, %v118, 0
    %v194 = vsel %vm145, %v119, 0
    %196 = vmatpush.bf16.msra.mxu0 0
    %197 = vmatpush.bf16.msra.mxu0 0
    %198 = vmatpush.bf16.msra.mxu0 0
    %199 = vmatpush.bf16.msra.mxu0 0
    %200 = vmatpush.bf16.msra.mxu0 0
    %201 = vmatpush.bf16.msra.mxu0 0
    %202 = vmatpush.bf16.msra.mxu0 %v187
    %203 = vmatpush.bf16.msra.mxu0 %v186
    %204 = vmatmul.bf16.gmra.mxu0 %v191
    %v205 = vpop.f32.mrf.mxu0
    %v206 = vadd.f32 %v176, %v205
    %v207 = vpop.f32.mrf.mxu0
    %v208 = vadd.f32 %v176, %v207
    %209 = vmatmul.bf16.gmra.mxu0 %v194
    %v210 = vpop.f32.mrf.mxu0
    %v211 = vadd.f32 %v176, %v210
    %v212 = vpop.f32.mrf.mxu0
    %213 = vdwg.mxu0
    %v214 = vpack.c.bf16 %v162, %v162
    %v215 = vpack.c.bf16 %v164, %v164
    %v216 = vpack.c.bf16 %v167, %v167
    %v217 = vpack.c.bf16 %v206, %v206
    %v218 = vpack.c.bf16 %v208, %v208
    %v219 = vpack.c.bf16 %v211, %v211
    %223 = vrot.lane.b32.xlu0 %v214, 120
    %v224 = vpop.permute.xlu0 %223
    %225 = vrot.lane.b32.xlu0 %v215, 120
    %v226 = vpop.permute.xlu0 %225
    %227 = vrot.lane.b32.xlu0 %v216, 120
    %v228 = vpop.permute.xlu0 %227
    %229 = vrot.lane.b32.xlu0 %v214, 112
    %v230 = vpop.permute.xlu0 %229
    %231 = vrot.lane.b32.xlu0 %v215, 112
    %v232 = vpop.permute.xlu0 %231
    %233 = vrot.lane.b32.xlu0 %v216, 112
    %v234 = vpop.permute.xlu0 %233
    %235 = vrot.lane.b32.xlu0 %v214, 104
    %v236 = vpop.permute.xlu0 %235
    %237 = vrot.lane.b32.xlu0 %v215, 104
    %v238 = vpop.permute.xlu0 %237
    %239 = vrot.lane.b32.xlu0 %v216, 104
    %v240 = vpop.permute.xlu0 %239
    %244 = vrot.lane.b32.xlu0 %v217, 120
    %v245 = vpop.permute.xlu0 %244
    %246 = vrot.lane.b32.xlu0 %v218, 120
    %v247 = vpop.permute.xlu0 %246
    %248 = vrot.lane.b32.xlu0 %v219, 120
    %v249 = vpop.permute.xlu0 %248
    %250 = vrot.lane.b32.xlu0 %v217, 112
    %v251 = vpop.permute.xlu0 %250
    %252 = vrot.lane.b32.xlu0 %v218, 112
    %v253 = vpop.permute.xlu0 %252
    %254 = vrot.lane.b32.xlu0 %v219, 112
    %v255 = vpop.permute.xlu0 %254
    %256 = vrot.lane.b32.xlu0 %v217, 104
    %v257 = vpop.permute.xlu0 %256
    %258 = vrot.lane.b32.xlu0 %v218, 104
    %v259 = vpop.permute.xlu0 %258
    %260 = vrot.lane.b32.xlu0 %v219, 104
    %v261 = vpop.permute.xlu0 %260
    %v262 = vlaneseq
    %v263 = vand.u32 %v262, 127
    %v264 = vld [vmem:[%s2] sm:$0x1]
    %v265 = vld [vmem:[%s2 + $0x1] sm:$0x1]
    %v266 = vld [vmem:[%s2 + $0x2] sm:$0x1]
    %267 = vset.pattern.permute.xlu0 0
    %268 = vperm.xlu0 %267, %v264
    %v269 = vpop.permute.xlu0 %268
    %v270 = vperm.slane %v269, 0
    %271 = vset.pattern.permute.xlu0 0
    %272 = vperm.xlu0 %271, %v265
    %v273 = vpop.permute.xlu0 %272
    %v274 = vperm.slane %v273, 0
    %275 = vset.pattern.permute.xlu0 0
    %276 = vperm.xlu0 %275, %v266
    %v277 = vpop.permute.xlu0 %276
    %v278 = vperm.slane %v277, 0
    %vm279 = vcmp.ge.s32.totalorder %v263, %v270
    %vm280 = vcmp.ge.s32.totalorder %v263, %v274
    %vm281 = vcmp.ge.s32.totalorder %v263, %v278
    %v282 = vsel %vm279, -1e+09, 0.0
    %v283 = vsel %vm280, -1e+09, 0.0
    %v284 = vsel %vm281, -1e+09, 0.0
    %v285 = vperm.slane %v282, 0
    %v286 = vperm.slane %v283, 0
    %v287 = vperm.slane %v284, 0
    %v288 = vunpack.c.l.b16 %v214
    %v289 = vpack.c.b16 %v288, %v288
    %290 = vrot.lane.b32.xlu0 %v289, 96
    %v291 = vpop.permute.xlu0 %290
    %vm292 = vcmask 64512
    %v294 = vsel %vm292, %v214, 0
    %v297 = vsel %vm292, %v291, 0
    %299 = vmatpush.bf16.xpose.msra.mxu0 0
    %300 = vmatpush.bf16.xpose.msra.mxu0 0
    %301 = vmatpush.bf16.xpose.msra.mxu0 0
    %302 = vmatpush.bf16.xpose.msra.mxu0 0
    %303 = vmatpush.bf16.xpose.msra.mxu0 0
    %304 = vmatpush.bf16.xpose.msra.mxu0 0
    %305 = vmatpush.bf16.xpose.msra.mxu0 0
    %306 = vmatpush.bf16.xpose.msra.mxu0 %v297
    %307 = vmatmul.bf16.gmra.mxu0 %v294
    %v308 = vpop.f32.mrf.mxu0
    %v309 = vadd.f32 %v285, %v308
    %v310 = vpop.f32.mrf.mxu0
    %311 = vdwg.mxu0
    %v312 = vunpack.c.l.b16 %v215
    %v313 = vpack.c.b16 %v312, %v312
    %314 = vrot.lane.b32.xlu0 %v313, 96
    %v315 = vpop.permute.xlu0 %314
    %v317 = vsel %vm292, %v215, 0
    %v320 = vsel %vm292, %v315, 0
    %322 = vmatpush.bf16.xpose.msra.mxu0 0
    %323 = vmatpush.bf16.xpose.msra.mxu0 0
    %324 = vmatpush.bf16.xpose.msra.mxu0 0
    %325 = vmatpush.bf16.xpose.msra.mxu0 0
    %326 = vmatpush.bf16.xpose.msra.mxu0 0
    %327 = vmatpush.bf16.xpose.msra.mxu0 0
    %328 = vmatpush.bf16.xpose.msra.mxu0 0
    %329 = vmatpush.bf16.xpose.msra.mxu0 %v320
    %330 = vmatmul.bf16.gmra.mxu0 %v317
    %v331 = vpop.f32.mrf.mxu0
    %v332 = vadd.f32 %v286, %v331
    %v333 = vpop.f32.mrf.mxu0
    %334 = vdwg.mxu0
    %v335 = vunpack.c.l.b16 %v216
    %v336 = vpack.c.b16 %v335, %v335
    %337 = vrot.lane.b32.xlu0 %v336, 96
    %v338 = vpop.permute.xlu0 %337
    %v340 = vsel %vm292, %v216, 0
    %v343 = vsel %vm292, %v338, 0
    %345 = vmatpush.bf16.xpose.msra.mxu0 0
    %346 = vmatpush.bf16.xpose.msra.mxu0 0
    %347 = vmatpush.bf16.xpose.msra.mxu0 0
    %348 = vmatpush.bf16.xpose.msra.mxu0 0
    %349 = vmatpush.bf16.xpose.msra.mxu0 0
    %350 = vmatpush.bf16.xpose.msra.mxu0 0
    %351 = vmatpush.bf16.xpose.msra.mxu0 0
    %352 = vmatpush.bf16.xpose.msra.mxu0 %v343
    %353 = vmatmul.bf16.gmra.mxu0 %v340
    %v354 = vpop.f32.mrf.mxu0
    %v355 = vadd.f32 %v287, %v354
    %v356 = vpop.f32.mrf.mxu0
    %357 = vdwg.mxu0
    %v358 = vunpack.c.l.b16 %v224
    %v359 = vpack.c.b16 %v358, %v358
    %360 = vrot.lane.b32.xlu0 %v359, 96
    %v361 = vpop.permute.xlu0 %360
    %v363 = vsel %vm292, %v224, 0
    %v366 = vsel %vm292, %v361, 0
    %368 = vmatpush.bf16.xpose.msra.mxu0 0
    %369 = vmatpush.bf16.xpose.msra.mxu0 0
    %370 = vmatpush.bf16.xpose.msra.mxu0 0
    %371 = vmatpush.bf16.xpose.msra.mxu0 0
    %372 = vmatpush.bf16.xpose.msra.mxu0 0
    %373 = vmatpush.bf16.xpose.msra.mxu0 0
    %374 = vmatpush.bf16.xpose.msra.mxu0 0
    %375 = vmatpush.bf16.xpose.msra.mxu0 %v366
    %376 = vmatmul.bf16.gmra.mxu0 %v363
    %v377 = vpop.f32.mrf.mxu0
    %v378 = vadd.f32 %v285, %v377
    %v379 = vpop.f32.mrf.mxu0
    %380 = vdwg.mxu0
    %v381 = vunpack.c.l.b16 %v226
    %v382 = vpack.c.b16 %v381, %v381
    %383 = vrot.lane.b32.xlu0 %v382, 96
    %v384 = vpop.permute.xlu0 %383
    %v386 = vsel %vm292, %v226, 0
    %v389 = vsel %vm292, %v384, 0
    %391 = vmatpush.bf16.xpose.msra.mxu0 0
    %392 = vmatpush.bf16.xpose.msra.mxu0 0
    %393 = vmatpush.bf16.xpose.msra.mxu0 0
    %394 = vmatpush.bf16.xpose.msra.mxu0 0
    %395 = vmatpush.bf16.xpose.msra.mxu0 0
    %396 = vmatpush.bf16.xpose.msra.mxu0 0
    %397 = vmatpush.bf16.xpose.msra.mxu0 0
    %398 = vmatpush.bf16.xpose.msra.mxu0 %v389
    %399 = vmatmul.bf16.gmra.mxu0 %v386
    %v400 = vpop.f32.mrf.mxu0
    %v401 = vadd.f32 %v286, %v400
    %v402 = vpop.f32.mrf.mxu0
    %403 = vdwg.mxu0
    %v404 = vunpack.c.l.b16 %v228
    %v405 = vpack.c.b16 %v404, %v404
    %406 = vrot.lane.b32.xlu0 %v405, 96
    %v407 = vpop.permute.xlu0 %406
    %v409 = vsel %vm292, %v228, 0
    %v412 = vsel %vm292, %v407, 0
    %414 = vmatpush.bf16.xpose.msra.mxu0 0
    %415 = vmatpush.bf16.xpose.msra.mxu0 0
    %416 = vmatpush.bf16.xpose.msra.mxu0 0
    %417 = vmatpush.bf16.xpose.msra.mxu0 0
    %418 = vmatpush.bf16.xpose.msra.mxu0 0
    %419 = vmatpush.bf16.xpose.msra.mxu0 0
    %420 = vmatpush.bf16.xpose.msra.mxu0 0
    %421 = vmatpush.bf16.xpose.msra.mxu0 %v412
    %422 = vmatmul.bf16.gmra.mxu0 %v409
    %v423 = vpop.f32.mrf.mxu0
    %v424 = vadd.f32 %v287, %v423
    %v425 = vpop.f32.mrf.mxu0
    %426 = vdwg.mxu0
    %v427 = vunpack.c.l.b16 %v230
    %v428 = vpack.c.b16 %v427, %v427
    %429 = vrot.lane.b32.xlu0 %v428, 96
    %v430 = vpop.permute.xlu0 %429
    %v432 = vsel %vm292, %v230, 0
    %v435 = vsel %vm292, %v430, 0
    %437 = vmatpush.bf16.xpose.msra.mxu0 0
    %438 = vmatpush.bf16.xpose.msra.mxu0 0
    %439 = vmatpush.bf16.xpose.msra.mxu0 0
    %440 = vmatpush.bf16.xpose.msra.mxu0 0
    %441 = vmatpush.bf16.xpose.msra.mxu0 0
    %442 = vmatpush.bf16.xpose.msra.mxu0 0
    %443 = vmatpush.bf16.xpose.msra.mxu0 0
    %444 = vmatpush.bf16.xpose.msra.mxu0 %v435
    %445 = vmatmul.bf16.gmra.mxu0 %v432
    %v446 = vpop.f32.mrf.mxu0
    %v447 = vadd.f32 %v285, %v446
    %v448 = vpop.f32.mrf.mxu0
    %449 = vdwg.mxu0
    %v450 = vunpack.c.l.b16 %v232
    %v451 = vpack.c.b16 %v450, %v450
    %452 = vrot.lane.b32.xlu0 %v451, 96
    %v453 = vpop.permute.xlu0 %452
    %v455 = vsel %vm292, %v232, 0
    %v458 = vsel %vm292, %v453, 0
    %460 = vmatpush.bf16.xpose.msra.mxu0 0
    %461 = vmatpush.bf16.xpose.msra.mxu0 0
    %462 = vmatpush.bf16.xpose.msra.mxu0 0
    %463 = vmatpush.bf16.xpose.msra.mxu0 0
    %464 = vmatpush.bf16.xpose.msra.mxu0 0
    %465 = vmatpush.bf16.xpose.msra.mxu0 0
    %466 = vmatpush.bf16.xpose.msra.mxu0 0
    %467 = vmatpush.bf16.xpose.msra.mxu0 %v458
    %468 = vmatmul.bf16.gmra.mxu0 %v455
    %v469 = vpop.f32.mrf.mxu0
    %v470 = vadd.f32 %v286, %v469
    %v471 = vpop.f32.mrf.mxu0
    %472 = vdwg.mxu0
    %v473 = vunpack.c.l.b16 %v234
    %v474 = vpack.c.b16 %v473, %v473
    %475 = vrot.lane.b32.xlu0 %v474, 96
    %v476 = vpop.permute.xlu0 %475
    %v478 = vsel %vm292, %v234, 0
    %v481 = vsel %vm292, %v476, 0
    %483 = vmatpush.bf16.xpose.msra.mxu0 0
    %484 = vmatpush.bf16.xpose.msra.mxu0 0
    %485 = vmatpush.bf16.xpose.msra.mxu0 0
    %486 = vmatpush.bf16.xpose.msra.mxu0 0
    %487 = vmatpush.bf16.xpose.msra.mxu0 0
    %488 = vmatpush.bf16.xpose.msra.mxu0 0
    %489 = vmatpush.bf16.xpose.msra.mxu0 0
    %490 = vmatpush.bf16.xpose.msra.mxu0 %v481
    %491 = vmatmul.bf16.gmra.mxu0 %v478
    %v492 = vpop.f32.mrf.mxu0
    %v493 = vadd.f32 %v287, %v492
    %v494 = vpop.f32.mrf.mxu0
    %495 = vdwg.mxu0
    %v496 = vunpack.c.l.b16 %v236
    %v497 = vpack.c.b16 %v496, %v496
    %498 = vrot.lane.b32.xlu0 %v497, 96
    %v499 = vpop.permute.xlu0 %498
    %v501 = vsel %vm292, %v236, 0
    %v504 = vsel %vm292, %v499, 0
    %506 = vmatpush.bf16.xpose.msra.mxu0 0
    %507 = vmatpush.bf16.xpose.msra.mxu0 0
    %508 = vmatpush.bf16.xpose.msra.mxu0 0
    %509 = vmatpush.bf16.xpose.msra.mxu0 0
    %510 = vmatpush.bf16.xpose.msra.mxu0 0
    %511 = vmatpush.bf16.xpose.msra.mxu0 0
    %512 = vmatpush.bf16.xpose.msra.mxu0 0
    %513 = vmatpush.bf16.xpose.msra.mxu0 %v504
    %514 = vmatmul.bf16.gmra.mxu0 %v501
    %v515 = vpop.f32.mrf.mxu0
    %v516 = vadd.f32 %v285, %v515
    %v517 = vpop.f32.mrf.mxu0
    %518 = vdwg.mxu0
    %v519 = vunpack.c.l.b16 %v238
    %v520 = vpack.c.b16 %v519, %v519
    %521 = vrot.lane.b32.xlu0 %v520, 96
    %v522 = vpop.permute.xlu0 %521
    %v524 = vsel %vm292, %v238, 0
    %v527 = vsel %vm292, %v522, 0
    %529 = vmatpush.bf16.xpose.msra.mxu0 0
    %530 = vmatpush.bf16.xpose.msra.mxu0 0
    %531 = vmatpush.bf16.xpose.msra.mxu0 0
    %532 = vmatpush.bf16.xpose.msra.mxu0 0
    %533 = vmatpush.bf16.xpose.msra.mxu0 0
    %534 = vmatpush.bf16.xpose.msra.mxu0 0
    %535 = vmatpush.bf16.xpose.msra.mxu0 0
    %536 = vmatpush.bf16.xpose.msra.mxu0 %v527
    %537 = vmatmul.bf16.gmra.mxu0 %v524
    %v538 = vpop.f32.mrf.mxu0
    %v539 = vadd.f32 %v286, %v538
    %v540 = vpop.f32.mrf.mxu0
    %541 = vdwg.mxu0
    %v542 = vunpack.c.l.b16 %v240
    %v543 = vpack.c.b16 %v542, %v542
    %544 = vrot.lane.b32.xlu0 %v543, 96
    %v545 = vpop.permute.xlu0 %544
    %v547 = vsel %vm292, %v240, 0
    %v550 = vsel %vm292, %v545, 0
    %552 = vmatpush.bf16.xpose.msra.mxu0 0
    %553 = vmatpush.bf16.xpose.msra.mxu0 0
    %554 = vmatpush.bf16.xpose.msra.mxu0 0
    %555 = vmatpush.bf16.xpose.msra.mxu0 0
    %556 = vmatpush.bf16.xpose.msra.mxu0 0
    %557 = vmatpush.bf16.xpose.msra.mxu0 0
    %558 = vmatpush.bf16.xpose.msra.mxu0 0
    %559 = vmatpush.bf16.xpose.msra.mxu0 %v550
    %560 = vmatmul.bf16.gmra.mxu0 %v547
    %v561 = vpop.f32.mrf.mxu0
    %v562 = vadd.f32 %v287, %v561
    %v563 = vpop.f32.mrf.mxu0
    %564 = vdwg.mxu0
    %v565 = vsel %vm292, %v309, -inf
    %566 = vmax.xlane.f32.xlu0 %v565
    %v567 = vpop.xlane.xlu0 %566
    %v568 = vsel %vm292, %v332, -inf
    %569 = vmax.xlane.f32.xlu0 %v568
    %v570 = vpop.xlane.xlu0 %569
    %v571 = vsel %vm292, %v355, -inf
    %572 = vmax.xlane.f32.xlu0 %v571
    %v573 = vpop.xlane.xlu0 %572
    %v574 = vsel %vm292, %v378, -inf
    %575 = vmax.xlane.f32.xlu0 %v574
    %v576 = vpop.xlane.xlu0 %575
    %v577 = vsel %vm292, %v401, -inf
    %578 = vmax.xlane.f32.xlu0 %v577
    %v579 = vpop.xlane.xlu0 %578
    %v580 = vsel %vm292, %v424, -inf
    %581 = vmax.xlane.f32.xlu0 %v580
    %v582 = vpop.xlane.xlu0 %581
    %v583 = vsel %vm292, %v447, -inf
    %584 = vmax.xlane.f32.xlu0 %v583
    %v585 = vpop.xlane.xlu0 %584
    %v586 = vsel %vm292, %v470, -inf
    %587 = vmax.xlane.f32.xlu0 %v586
    %v588 = vpop.xlane.xlu0 %587
    %v589 = vsel %vm292, %v493, -inf
    %590 = vmax.xlane.f32.xlu0 %v589
    %v591 = vpop.xlane.xlu0 %590
    %v592 = vsel %vm292, %v516, -inf
    %593 = vmax.xlane.f32.xlu0 %v592
    %v594 = vpop.xlane.xlu0 %593
    %v595 = vsel %vm292, %v539, -inf
    %596 = vmax.xlane.f32.xlu0 %v595
    %v597 = vpop.xlane.xlu0 %596
    %v598 = vsel %vm292, %v562, -inf
    %599 = vmax.xlane.f32.xlu0 %v598
    %v600 = vpop.xlane.xlu0 %599
    %v601 = vsub.f32 %v309, %v567
    %v602 = vsub.f32 %v332, %v570
    %v603 = vsub.f32 %v355, %v573
    %v604 = vsub.f32 %v378, %v576
    %v605 = vsub.f32 %v401, %v579
    %v606 = vsub.f32 %v424, %v582
    %v607 = vsub.f32 %v447, %v585
    %v608 = vsub.f32 %v470, %v588
    %v609 = vsub.f32 %v493, %v591
    %v610 = vsub.f32 %v516, %v594
    %v611 = vsub.f32 %v539, %v597
    %v612 = vsub.f32 %v562, %v600
    %v613 = vmul.f32 %v601, 1.442695
    %v614 = vpow.pop %v613
    %v615 = vmul.f32 %v602, 1.442695
    %v616 = vpow.pop %v615
    %v617 = vmul.f32 %v603, 1.442695
    %v618 = vpow.pop %v617
    %v619 = vmul.f32 %v604, 1.442695
    %v620 = vpow.pop %v619
    %v621 = vmul.f32 %v605, 1.442695
    %v622 = vpow.pop %v621
    %v623 = vmul.f32 %v606, 1.442695
    %v624 = vpow.pop %v623
    %v625 = vmul.f32 %v607, 1.442695
    %v626 = vpow.pop %v625
    %v627 = vmul.f32 %v608, 1.442695
    %v628 = vpow.pop %v627
    %v629 = vmul.f32 %v609, 1.442695
    %v630 = vpow.pop %v629
    %v631 = vmul.f32 %v610, 1.442695
    %v632 = vpow.pop %v631
    %v633 = vmul.f32 %v611, 1.442695
    %v634 = vpow.pop %v633
    %v635 = vmul.f32 %v612, 1.442695
    %v636 = vpow.pop %v635
    %v637 = vsel %vm292, %v614, 0.0
    %638 = vadd.xlane.f32.xlu0 %v637
    %v639 = vpop.xlane.xlu0 %638
    %v640 = vsel %vm292, %v616, 0.0
    %641 = vadd.xlane.f32.xlu0 %v640
    %v642 = vpop.xlane.xlu0 %641
    %v643 = vsel %vm292, %v618, 0.0
    %644 = vadd.xlane.f32.xlu0 %v643
    %v645 = vpop.xlane.xlu0 %644
    %v646 = vsel %vm292, %v620, 0.0
    %647 = vadd.xlane.f32.xlu0 %v646
    %v648 = vpop.xlane.xlu0 %647
    %v649 = vsel %vm292, %v622, 0.0
    %650 = vadd.xlane.f32.xlu0 %v649
    %v651 = vpop.xlane.xlu0 %650
    %v652 = vsel %vm292, %v624, 0.0
    %653 = vadd.xlane.f32.xlu0 %v652
    %v654 = vpop.xlane.xlu0 %653
    %v655 = vsel %vm292, %v626, 0.0
    %656 = vadd.xlane.f32.xlu0 %v655
    %v657 = vpop.xlane.xlu0 %656
    %v658 = vsel %vm292, %v628, 0.0
    %659 = vadd.xlane.f32.xlu0 %v658
    %v660 = vpop.xlane.xlu0 %659
    %v661 = vsel %vm292, %v630, 0.0
    %662 = vadd.xlane.f32.xlu0 %v661
    %v663 = vpop.xlane.xlu0 %662
    %v664 = vsel %vm292, %v632, 0.0
    %665 = vadd.xlane.f32.xlu0 %v664
    %v666 = vpop.xlane.xlu0 %665
    %v667 = vsel %vm292, %v634, 0.0
    %668 = vadd.xlane.f32.xlu0 %v667
    %v669 = vpop.xlane.xlu0 %668
    %v670 = vsel %vm292, %v636, 0.0
    %671 = vadd.xlane.f32.xlu0 %v670
    %v672 = vpop.xlane.xlu0 %671
    %v673 = vrcp.pop %v639
    %v674 = vrcp.pop %v642
    %v675 = vrcp.pop %v645
    %v676 = vrcp.pop %v648
    %v677 = vrcp.pop %v651
    %v678 = vrcp.pop %v654
    %v679 = vrcp.pop %v657
    %v680 = vrcp.pop %v660
    %v681 = vrcp.pop %v663
    %v682 = vrcp.pop %v666
    %v683 = vrcp.pop %v669
    %v684 = vrcp.pop %v672
    %v685 = vmul.f32 %v614, %v673
    %v686 = vmul.f32 %v616, %v674
    %v687 = vmul.f32 %v618, %v675
    %v688 = vmul.f32 %v620, %v676
    %v689 = vmul.f32 %v622, %v677
    %v690 = vmul.f32 %v624, %v678
    %v691 = vmul.f32 %v626, %v679
    %v692 = vmul.f32 %v628, %v680
    %v693 = vmul.f32 %v630, %v681
    %v694 = vmul.f32 %v632, %v682
    %v695 = vmul.f32 %v634, %v683
    %v696 = vmul.f32 %v636, %v684
    %v697 = vpack.c.bf16 %v685, %v685
    %v698 = vpack.c.bf16 %v686, %v686
    %v699 = vpack.c.bf16 %v687, %v687
    %v700 = vpack.c.bf16 %v688, %v688
    %v701 = vpack.c.bf16 %v689, %v689
    %v702 = vpack.c.bf16 %v690, %v690
    %v703 = vpack.c.bf16 %v691, %v691
    %v704 = vpack.c.bf16 %v692, %v692
    %v705 = vpack.c.bf16 %v693, %v693
    %v706 = vpack.c.bf16 %v694, %v694
    %v707 = vpack.c.bf16 %v695, %v695
    %v708 = vpack.c.bf16 %v696, %v696
    %v710 = vsel %vm292, %v697, 0
    %vm712 = vcmask 1043456
    %v714 = vsel %vm712, %v217, 0
    %716 = vmatpush.bf16.msra.mxu0 0
    %717 = vmatpush.bf16.msra.mxu0 0
    %718 = vmatpush.bf16.msra.mxu0 0
    %719 = vmatpush.bf16.msra.mxu0 0
    %720 = vmatpush.bf16.msra.mxu0 0
    %721 = vmatpush.bf16.msra.mxu0 0
    %722 = vmatpush.bf16.msra.mxu0 0
    %723 = vmatpush.bf16.msra.mxu0 %v714
    %724 = vmatmul.bf16.gmra.mxu0 %v710
    %v725 = vpop.f32.mrf.mxu0
    %v726 = vadd.f32 0.0, %v725
    %v727 = vpop.f32.mrf.mxu0
    %728 = vdwg.mxu0
    %v730 = vsel %vm292, %v698, 0
    %v733 = vsel %vm712, %v218, 0
    %735 = vmatpush.bf16.msra.mxu0 0
    %736 = vmatpush.bf16.msra.mxu0 0
    %737 = vmatpush.bf16.msra.mxu0 0
    %738 = vmatpush.bf16.msra.mxu0 0
    %739 = vmatpush.bf16.msra.mxu0 0
    %740 = vmatpush.bf16.msra.mxu0 0
    %741 = vmatpush.bf16.msra.mxu0 0
    %742 = vmatpush.bf16.msra.mxu0 %v733
    %743 = vmatmul.bf16.gmra.mxu0 %v730
    %v744 = vpop.f32.mrf.mxu0
    %v745 = vadd.f32 0.0, %v744
    %v746 = vpop.f32.mrf.mxu0
    %747 = vdwg.mxu0
    %v749 = vsel %vm292, %v699, 0
    %v752 = vsel %vm712, %v219, 0
    %754 = vmatpush.bf16.msra.mxu0 0
    %755 = vmatpush.bf16.msra.mxu0 0
    %756 = vmatpush.bf16.msra.mxu0 0
    %757 = vmatpush.bf16.msra.mxu0 0
    %758 = vmatpush.bf16.msra.mxu0 0
    %759 = vmatpush.bf16.msra.mxu0 0
    %760 = vmatpush.bf16.msra.mxu0 0
    %761 = vmatpush.bf16.msra.mxu0 %v752
    %762 = vmatmul.bf16.gmra.mxu0 %v749
    %v763 = vpop.f32.mrf.mxu0
    %v764 = vadd.f32 0.0, %v763
    %v765 = vpop.f32.mrf.mxu0
    %766 = vdwg.mxu0
    %v768 = vsel %vm292, %v700, 0
    %v771 = vsel %vm712, %v245, 0
    %773 = vmatpush.bf16.msra.mxu0 0
    %774 = vmatpush.bf16.msra.mxu0 0
    %775 = vmatpush.bf16.msra.mxu0 0
    %776 = vmatpush.bf16.msra.mxu0 0
    %777 = vmatpush.bf16.msra.mxu0 0
    %778 = vmatpush.bf16.msra.mxu0 0
    %779 = vmatpush.bf16.msra.mxu0 0
    %780 = vmatpush.bf16.msra.mxu0 %v771
    %781 = vmatmul.bf16.gmra.mxu0 %v768
    %v782 = vpop.f32.mrf.mxu0
    %v783 = vadd.f32 0.0, %v782
    %v784 = vpop.f32.mrf.mxu0
    %785 = vdwg.mxu0
    %v787 = vsel %vm292, %v701, 0
    %v790 = vsel %vm712, %v247, 0
    %792 = vmatpush.bf16.msra.mxu0 0
    %793 = vmatpush.bf16.msra.mxu0 0
    %794 = vmatpush.bf16.msra.mxu0 0
    %795 = vmatpush.bf16.msra.mxu0 0
    %796 = vmatpush.bf16.msra.mxu0 0
    %797 = vmatpush.bf16.msra.mxu0 0
    %798 = vmatpush.bf16.msra.mxu0 0
    %799 = vmatpush.bf16.msra.mxu0 %v790
    %800 = vmatmul.bf16.gmra.mxu0 %v787
    %v801 = vpop.f32.mrf.mxu0
    %v802 = vadd.f32 0.0, %v801
    %v803 = vpop.f32.mrf.mxu0
    %804 = vdwg.mxu0
    %v806 = vsel %vm292, %v702, 0
    %v809 = vsel %vm712, %v249, 0
    %811 = vmatpush.bf16.msra.mxu0 0
    %812 = vmatpush.bf16.msra.mxu0 0
    %813 = vmatpush.bf16.msra.mxu0 0
    %814 = vmatpush.bf16.msra.mxu0 0
    %815 = vmatpush.bf16.msra.mxu0 0
    %816 = vmatpush.bf16.msra.mxu0 0
    %817 = vmatpush.bf16.msra.mxu0 0
    %818 = vmatpush.bf16.msra.mxu0 %v809
    %819 = vmatmul.bf16.gmra.mxu0 %v806
    %v820 = vpop.f32.mrf.mxu0
    %v821 = vadd.f32 0.0, %v820
    %v822 = vpop.f32.mrf.mxu0
    %823 = vdwg.mxu0
    %v825 = vsel %vm292, %v703, 0
    %v828 = vsel %vm712, %v251, 0
    %830 = vmatpush.bf16.msra.mxu0 0
    %831 = vmatpush.bf16.msra.mxu0 0
    %832 = vmatpush.bf16.msra.mxu0 0
    %833 = vmatpush.bf16.msra.mxu0 0
    %834 = vmatpush.bf16.msra.mxu0 0
    %835 = vmatpush.bf16.msra.mxu0 0
    %836 = vmatpush.bf16.msra.mxu0 0
    %837 = vmatpush.bf16.msra.mxu0 %v828
    %838 = vmatmul.bf16.gmra.mxu0 %v825
    %v839 = vpop.f32.mrf.mxu0
    %v840 = vadd.f32 0.0, %v839
    %v841 = vpop.f32.mrf.mxu0
    %842 = vdwg.mxu0
    %v844 = vsel %vm292, %v704, 0
    %v847 = vsel %vm712, %v253, 0
    %849 = vmatpush.bf16.msra.mxu0 0
    %850 = vmatpush.bf16.msra.mxu0 0
    %851 = vmatpush.bf16.msra.mxu0 0
    %852 = vmatpush.bf16.msra.mxu0 0
    %853 = vmatpush.bf16.msra.mxu0 0
    %854 = vmatpush.bf16.msra.mxu0 0
    %855 = vmatpush.bf16.msra.mxu0 0
    %856 = vmatpush.bf16.msra.mxu0 %v847
    %857 = vmatmul.bf16.gmra.mxu0 %v844
    %v858 = vpop.f32.mrf.mxu0
    %v859 = vadd.f32 0.0, %v858
    %v860 = vpop.f32.mrf.mxu0
    %861 = vdwg.mxu0
    %v863 = vsel %vm292, %v705, 0
    %v866 = vsel %vm712, %v255, 0
    %868 = vmatpush.bf16.msra.mxu0 0
    %869 = vmatpush.bf16.msra.mxu0 0
    %870 = vmatpush.bf16.msra.mxu0 0
    %871 = vmatpush.bf16.msra.mxu0 0
    %872 = vmatpush.bf16.msra.mxu0 0
    %873 = vmatpush.bf16.msra.mxu0 0
    %874 = vmatpush.bf16.msra.mxu0 0
    %875 = vmatpush.bf16.msra.mxu0 %v866
    %876 = vmatmul.bf16.gmra.mxu0 %v863
    %v877 = vpop.f32.mrf.mxu0
    %v878 = vadd.f32 0.0, %v877
    %v879 = vpop.f32.mrf.mxu0
    %880 = vdwg.mxu0
    %v882 = vsel %vm292, %v706, 0
    %v885 = vsel %vm712, %v257, 0
    %887 = vmatpush.bf16.msra.mxu0 0
    %888 = vmatpush.bf16.msra.mxu0 0
    %889 = vmatpush.bf16.msra.mxu0 0
    %890 = vmatpush.bf16.msra.mxu0 0
    %891 = vmatpush.bf16.msra.mxu0 0
    %892 = vmatpush.bf16.msra.mxu0 0
    %893 = vmatpush.bf16.msra.mxu0 0
    %894 = vmatpush.bf16.msra.mxu0 %v885
    %895 = vmatmul.bf16.gmra.mxu0 %v882
    %v896 = vpop.f32.mrf.mxu0
    %v897 = vadd.f32 0.0, %v896
    %v898 = vpop.f32.mrf.mxu0
    %899 = vdwg.mxu0
    %v901 = vsel %vm292, %v707, 0
    %v904 = vsel %vm712, %v259, 0
    %906 = vmatpush.bf16.msra.mxu0 0
    %907 = vmatpush.bf16.msra.mxu0 0
    %908 = vmatpush.bf16.msra.mxu0 0
    %909 = vmatpush.bf16.msra.mxu0 0
    %910 = vmatpush.bf16.msra.mxu0 0
    %911 = vmatpush.bf16.msra.mxu0 0
    %912 = vmatpush.bf16.msra.mxu0 0
    %913 = vmatpush.bf16.msra.mxu0 %v904
    %914 = vmatmul.bf16.gmra.mxu0 %v901
    %v915 = vpop.f32.mrf.mxu0
    %v916 = vadd.f32 0.0, %v915
    %v917 = vpop.f32.mrf.mxu0
    %918 = vdwg.mxu0
    %v920 = vsel %vm292, %v708, 0
    %v923 = vsel %vm712, %v261, 0
    %925 = vmatpush.bf16.msra.mxu0 0
    %926 = vmatpush.bf16.msra.mxu0 0
    %927 = vmatpush.bf16.msra.mxu0 0
    %928 = vmatpush.bf16.msra.mxu0 0
    %929 = vmatpush.bf16.msra.mxu0 0
    %930 = vmatpush.bf16.msra.mxu0 0
    %931 = vmatpush.bf16.msra.mxu0 0
    %932 = vmatpush.bf16.msra.mxu0 %v923
    %933 = vmatmul.bf16.gmra.mxu0 %v920
    %v934 = vpop.f32.mrf.mxu0
    %v935 = vadd.f32 0.0, %v934
    %v936 = vpop.f32.mrf.mxu0
    %937 = vdwg.mxu0
    %941 = vrot.lane.b32.xlu0 %v783, 8
    %v942 = vpop.permute.xlu0 %941
    %943 = vrot.lane.b32.xlu0 %v802, 8
    %v944 = vpop.permute.xlu0 %943
    %945 = vrot.lane.b32.xlu0 %v821, 8
    %v946 = vpop.permute.xlu0 %945
    %953 = vrot.lane.b32.xlu0 %v840, 16
    %v954 = vpop.permute.xlu0 %953
    %955 = vrot.lane.b32.xlu0 %v859, 16
    %v956 = vpop.permute.xlu0 %955
    %957 = vrot.lane.b32.xlu0 %v878, 16
    %v958 = vpop.permute.xlu0 %957
    %965 = vrot.lane.b32.xlu0 %v897, 24
    %v966 = vpop.permute.xlu0 %965
    %967 = vrot.lane.b32.xlu0 %v916, 24
    %v968 = vpop.permute.xlu0 %967
    %969 = vrot.lane.b32.xlu0 %v935, 24
    %v970 = vpop.permute.xlu0 %969
    %v974 = vsel %vm292, %v726, %v942
    %v975 = vsel %vm292, %v745, %v944
    %v976 = vsel %vm292, %v764, %v946
    %vm977 = vcmask 130048
    %v978 = vsel %vm977, %v974, %v954
    %v979 = vsel %vm977, %v975, %v956
    %v980 = vsel %vm977, %v976, %v958
    %vm981 = vcmask 195584
    %v982 = vsel %vm981, %v978, %v966
    %v983 = vsel %vm981, %v979, %v968
    %v984 = vsel %vm981, %v980, %v970
    %v985 = vpack.c.bf16 %v983, %v982
    %v986 = vpack.c.bf16 %v984, %v984
    %v987 = vld [vmem:[#allocation10] sm:$0xf]
    %v988 = vld [vmem:[#allocation10 + $0x4] sm:$0xf]
    %v989 = vld [vmem:[#allocation10 + $0x8] sm:$0xf]
    %v990 = vld [vmem:[#allocation10 + $0xc] sm:$0xf]
    %v991 = vld [vmem:[%s8] sm:$0x1]
    %v993 = vperm.slane %v991, 0
    %v999 = vunpack.c.l.b16 %v987
    %v1000 = vunpack.c.l.b16 %v988
    %v1001 = vunpack.c.l.b16 %v989
    %v1002 = vunpack.c.l.b16 %v990
    %v1003 = vpack.c.b16 %v1000, %v999
    %v1004 = vpack.c.b16 %v1002, %v1001
    %v1008 = vsel %vm145, %v985, 0
    %v1011 = vsel %vm145, %v986, 0
    %1013 = vmatpush.bf16.msra.mxu0 0
    %1014 = vmatpush.bf16.msra.mxu0 0
    %1015 = vmatpush.bf16.msra.mxu0 0
    %1016 = vmatpush.bf16.msra.mxu0 0
    %1017 = vmatpush.bf16.msra.mxu0 0
    %1018 = vmatpush.bf16.msra.mxu0 0
    %1019 = vmatpush.bf16.msra.mxu0 %v1004
    %1020 = vmatpush.bf16.msra.mxu0 %v1003
    %1021 = vmatmul.bf16.gmra.mxu0 %v1008
    %v1022 = vpop.f32.mrf.mxu0
    %v1023 = vadd.f32 %v993, %v1022
    %v1024 = vpop.f32.mrf.mxu0
    %v1025 = vadd.f32 %v993, %v1024
    %1026 = vmatmul.bf16.gmra.mxu0 %v1011
    %v1027 = vpop.f32.mrf.mxu0
    %v1028 = vadd.f32 %v993, %v1027
    %v1029 = vpop.f32.mrf.mxu0
    %1030 = vdwg.mxu0
    %1031 = vst.msk [vmem:[#allocation11] sm:$0xff] %vm145, %v1023
    %1032 = vst.msk [vmem:[#allocation11 + $0x8] sm:$0xff] %vm145, %v1025
    %1033 = vst.msk [vmem:[#allocation11 + $0x10] sm:$0xff] %vm145, %v1028
    // Predicated region
    $region58: #{tpu_custom_call.1} parent=1 // pred_check
      _
    $region59: #{tpu_custom_call.1} parent=1 // pred_check_branch
      %1035 = sbr.rel (0) target = $region61
    $region60: #{tpu_custom_call.1} parent=1 // pred_region
      %1037 = vsyncadd [#allocation4], 0
      %s1038 = sshll.u32 [#allocation11], 4
      %s1039 = int_to_ptr.vmem [resolvable:$true] %s1038
      %s1040 = sshll.u32 %s9, 4
      %s1041 = int_to_ptr.hbm [resolvable:$true] %s1040
      %1046 = dma.vmem_to_hbm [thread:$0]  %s1039, 384, %s1041, [#allocation4], 128, 128, 8
    $region61: #{tpu_custom_call.1} parent=1 // pred_fallthru
      _
    // Predicated region
    $region62: #{tpu_custom_call.1} parent=1 // pred_check
      _
    $region63: #{tpu_custom_call.1} parent=1 // pred_check_branch
      %1048 = sbr.rel (0) target = $region65
    $region64: #{tpu_custom_call.1} parent=1 // pred_region
      %1050 = dma.done [#allocation4], 384
    $region65: #{tpu_custom_call.1} parent=1 // pred_fallthru
      _
    %1051 = vsyncpa [#allocation3], 1
    %1052 = vsyncpa [#allocation6], 1
    %1053 = vsyncpa [#allocation9], 1
    %1054 = vsyncpa [#allocation4], 1

</llo_original>
